<compile_context>
chip_gen: v6e
topology: v6e:2x2x1
jax: 0.10.0
libtpu: 0.0.40
codegen_flags: <defaults>
</compile_context>

<pallas_src>
import functools

import jax
import jax.numpy as jnp
from jax.experimental import pallas as pl
from jax.experimental.pallas import tpu as pltpu


# ----------------------------------------------------------------------------
# Pallas kernel: fused (u * i).sum(over latent) -> sigmoid, one batch tile/step
# ----------------------------------------------------------------------------
def _puremf_fwd_kernel(u_ref, i_ref, o_ref):
    # u_ref, i_ref : (D, TB) tiles -- latent dim on sublanes, batch on lanes.
    # o_ref        : (1, TB) lane-dense output tile.
    prod = u_ref[...].astype(jnp.float32) * i_ref[...].astype(jnp.float32)
    s = jnp.sum(prod, axis=0, keepdims=True)                  # (1, TB), f32
    # sigmoid(s) = 1 / (1 + exp(-s)); exp + approx reciprocal both go to EUP.
    o_ref[...] = pl.reciprocal(1.0 + jnp.exp(-s), approx=True).astype(o_ref.dtype)


def _round_up(x, m):
    return ((x + m - 1) // m) * m


def _pick_batch_tile(d, itemsize, budget_bytes=12 * 1024 * 1024, cap=4096):
    """Largest batch tile (multiple of 128, <= cap) whose double-buffered
    input tiles (2 arrays x 2 pipeline buffers x d x tb x itemsize) fit the
    VMEM budget.  Budget is conservative so it fits every generation's scoped
    VMEM even before raising vmem_limit_bytes."""
    per_col = 2 * 2 * d * itemsize
    tb = (budget_bytes // per_col) // 128 * 128
    return int(max(128, min(cap, tb)))


@functools.partial(jax.jit, static_argnames=("tb",))
def puremf_forward(users_emb, items_emb, *, tb=None):
    """users_emb, items_emb: (B, D) arrays (any float dtype).
    Returns sigmoid(rowwise dot) scores, shape (B,), float32."""
    B, D = users_emb.shape
    itemsize = jnp.dtype(users_emb.dtype).itemsize

    if tb is None:
        tb = _pick_batch_tile(D, itemsize)
    tb = min(tb, _round_up(max(B, 1), 128))   # don't over-tile tiny batches
    B_pad = _round_up(max(B, 1), tb)

    # Pad ragged batch, then present lane-dense (D, B_pad) slabs to the kernel
    # (layout plumbing only; padded rows produce sigmoid(0) and are sliced off).
    if B_pad != B:
        users_emb = jnp.pad(users_emb, ((0, B_pad - B), (0, 0)))
        items_emb = jnp.pad(items_emb, ((0, B_pad - B), (0, 0)))
    u_t = users_emb.T                                     # (D, B_pad)
    i_t = items_emb.T                                     # (D, B_pad)

    out = pl.pallas_call(
        _puremf_fwd_kernel,
        out_shape=jax.ShapeDtypeStruct((1, B_pad), jnp.float32),
        grid=(pl.cdiv(B_pad, tb),),
        in_specs=[
            pl.BlockSpec((D, tb), lambda b: (0, b)),
            pl.BlockSpec((D, tb), lambda b: (0, b)),
        ],
        out_specs=pl.BlockSpec((1, tb), lambda b: (0, b)),
        compiler_params=pltpu.CompilerParams(
            dimension_semantics=("parallel",),
            vmem_limit_bytes=32 * 1024 * 1024,
        ),
    )(u_t, i_t)
    return out[0, :B]


# ----------------------------------------------------------------------------
# PureMF module (parameters + glue)
# ----------------------------------------------------------------------------
class PureMFPallas:
    def __init__(self, num_users, num_items, latent_dim, key,
                 param_dtype=jnp.bfloat16):
        ku, ki = jax.random.split(key)
        # N(0, 1) init ("Normal distribution N(0,1) initialization for PureMF"),
        # stored in bf16 to halve HBM traffic of this bandwidth-bound forward.
        self.embedding_user = jax.random.normal(
            ku, (num_users, latent_dim), dtype=jnp.float32).astype(param_dtype)
        self.embedding_item = jax.random.normal(
            ki, (num_items, latent_dim), dtype=jnp.float32).astype(param_dtype)

    def forward(self, users, items):
        users = users.astype(jnp.int32)
        items = items.astype(jnp.int32)
        # Embedding gather stays in XLA (see TODO at top of file).
        users_emb = jnp.take(self.embedding_user, users, axis=0)   # (B, D)
        items_emb = jnp.take(self.embedding_item, items, axis=0)   # (B, D)
        return puremf_forward(users_emb, items_emb)


if __name__ == "__main__":
    key = jax.random.PRNGKey(0)
    k_model, k_u, k_i = jax.random.split(key, 3)

    NUM_USERS, NUM_ITEMS, LATENT_DIM = 64, 96, 32
    BATCH = 16

    model = PureMFPallas(NUM_USERS, NUM_ITEMS, LATENT_DIM, k_model)

    users = jax.random.randint(k_u, (BATCH,), 0, NUM_USERS, dtype=jnp.int32)
    items = jax.random.randint(k_i, (BATCH,), 0, NUM_ITEMS, dtype=jnp.int32)

    scores = model.forward(users, items)
    scores = jax.block_until_ready(scores)

    # pure-JAX reference check (same bf16 params, f32 math)
    ue = model.embedding_user[users].astype(jnp.float32)
    ie = model.embedding_item[items].astype(jnp.float32)
    ref = jax.nn.sigmoid(jnp.sum(ue * ie, axis=1))
    assert scores.shape == (BATCH,)
    assert jnp.allclose(scores, ref, atol=2e-3, rtol=2e-3), (
        f"max abs err {jnp.max(jnp.abs(scores - ref))}")

    print("KERNEL_OK")
</pallas_src>

<mosaic_0001>
module attributes {stable_mosaic.version = 11 : i64} {
  func.func @_puremf_fwd_kernel(%arg0: i32, %arg1: memref<32x128xbf16, #tpu.memory_space<vmem>>, %arg2: memref<32x128xbf16, #tpu.memory_space<vmem>>, %arg3: memref<1x128xf32, #tpu.memory_space<vmem>>) attributes {dimension_semantics = [#tpu.dimension_semantics<parallel>], iteration_bounds = array<i64: 1>, scalar_prefetch = 0 : i64, scratch_operands = 0 : i64, tpu.core_type = #tpu.core_type<tc>, window_params = [{transform_indices = @transform_0, window_bounds = array<i64: 32, 128>}, {transform_indices = @transform_1, window_bounds = array<i64: 32, 128>}, {transform_indices = @transform_2, window_bounds = array<i64: 1, 128>}]} {
    %c0 = arith.constant 0 : index
    %c0_0 = arith.constant 0 : index
    %0 = vector.load %arg1[%c0, %c0_0] : memref<32x128xbf16, #tpu.memory_space<vmem>>, vector<32x128xbf16>
    %1 = arith.extf %0 : vector<32x128xbf16> to vector<32x128xf32>
    %c0_1 = arith.constant 0 : index
    %c0_2 = arith.constant 0 : index
    %2 = vector.load %arg2[%c0_1, %c0_2] : memref<32x128xbf16, #tpu.memory_space<vmem>>, vector<32x128xbf16>
    %3 = arith.extf %2 : vector<32x128xbf16> to vector<32x128xf32>
    %4 = arith.mulf %1, %3 : vector<32x128xf32>
    %cst = arith.constant dense<0.000000e+00> : vector<128xf32>
    %5 = vector.multi_reduction <add>, %4, %cst [0] : vector<32x128xf32> to vector<128xf32>
    %6 = vector.shape_cast %5 : vector<128xf32> to vector<1x128xf32>
    %cst_3 = arith.constant 0.000000e+00 : f32
    %7 = vector.broadcast %cst_3 : f32 to vector<1x128xf32>
    %8 = arith.subf %7, %6 : vector<1x128xf32>
    %9 = math.exp %8 : vector<1x128xf32>
    %cst_4 = arith.constant 1.000000e+00 : f32
    %10 = vector.broadcast %cst_4 : f32 to vector<1x128xf32>
    %11 = arith.addf %10, %9 : vector<1x128xf32>
    %12 = tpu.reciprocal %11 {approx = true} : vector<1x128xf32> -> vector<1x128xf32>
    %c0_5 = arith.constant 0 : index
    %c0_6 = arith.constant 0 : index
    %13 = vector.load %arg3[%c0_5, %c0_6] : memref<1x128xf32, #tpu.memory_space<vmem>>, vector<1x128xf32>
    tpu.vector_store %arg3[%c0_5, %c0_6], %12 {strides = array<i32>} : memref<1x128xf32, #tpu.memory_space<vmem>>, vector<1x128xf32>,
    return
  }
  func.func @transform_0(%arg0: i32) -> (i32, i32) {
    %c0_i32 = arith.constant 0 : i32
    %c0_i32_0 = arith.constant 0 : i32
    return %c0_i32, %arg0 : i32, i32
  }
  func.func @transform_1(%arg0: i32) -> (i32, i32) {
    %c0_i32 = arith.constant 0 : i32
    %c0_i32_0 = arith.constant 0 : i32
    return %c0_i32, %arg0 : i32, i32
  }
  func.func @transform_2(%arg0: i32) -> (i32, i32) {
    %c0_i32 = arith.constant 0 : i32
    %c0_i32_0 = arith.constant 0 : i32
    return %c0_i32, %arg0 : i32, i32
  }
}

</mosaic_0001>

<llo_original>
// kernel: puremf_forward.1
$region0: #{puremf_forward.1}
  #allocation0 [shape = 'u32[]', space=smem, size = 0x4, offset = 0x4, fixed_abs, tag = 'smem constant byte address 0x4 - core index']
  #allocation1 [shape = 'u32[144,128]{1,0:T(1,128)}', space=vmem, size = 0x12000, scoped, tag = 'internal scratch']
  %s0 = inlined_call_operand.vmem [shape: bf16[32,128], index: 0, kind: input, shape index: {}]
  %s1 = inlined_call_operand.vmem [shape: bf16[32,128], index: 1, kind: input, shape index: {}]
  %s2 = inlined_call_operand.vmem [shape: f32[1,128], index: 2, kind: output, shape index: {}]
  %s3 = sld [smem:[#allocation0]]
  $region18: #{puremf_forward.1} parent=0
    _
  %s5 = ssub.s32 1, %s3
  %s6 = scalar_select 0, %s5, %s3
  // Predicated region
  $region2: #{puremf_forward.1} parent=0 // pred_check
    _
  $region3: #{puremf_forward.1} parent=0 // pred_check_branch
    %8 = sbr.rel (0) target = $region5
  $region4: #{puremf_forward.1} parent=0 // pred_region
    _
  $region5: #{puremf_forward.1} parent=0 // pred_fallthru
    _
  // Predicated region
  $region6: #{puremf_forward.1} parent=0 // pred_check
    _
  $region7: #{puremf_forward.1} parent=0 // pred_check_branch
    %10 = sbr.rel (0) target = $region9
  $region8: #{puremf_forward.1} parent=0 // pred_region
    _
  $region9: #{puremf_forward.1} parent=0 // pred_fallthru
    _
  %v11 = vld [vmem:[%s0] sm:$0xf]
  %v12 = vld [vmem:[%s0 + $0x4] sm:$0xf]
  %v13 = vld [vmem:[%s0 + $0x8] sm:$0xf]
  %v14 = vld [vmem:[%s0 + $0xc] sm:$0xf]
  %v15 = vunpack.c.l.bf16 %v11
  %v16 = vunpack.c.l.bf16 %v12
  %v17 = vunpack.c.l.bf16 %v13
  %v18 = vunpack.c.l.bf16 %v14
  %v19 = vld [vmem:[%s1] sm:$0xf]
  %v20 = vld [vmem:[%s1 + $0x4] sm:$0xf]
  %v21 = vld [vmem:[%s1 + $0x8] sm:$0xf]
  %v22 = vld [vmem:[%s1 + $0xc] sm:$0xf]
  %v23 = vunpack.c.l.bf16 %v19
  %v24 = vunpack.c.l.bf16 %v20
  %v25 = vunpack.c.l.bf16 %v21
  %v26 = vunpack.c.l.bf16 %v22
  %v27 = vmul.f32 %v15, %v23
  %v28 = vmul.f32 %v16, %v24
  %v29 = vmul.f32 %v17, %v25
  %v30 = vmul.f32 %v18, %v26
  %v31 = vadd.f32 %v27, %v28
  %v32 = vadd.f32 %v31, %v29
  %v33 = vadd.f32 %v32, %v30
  %v34 = vrot.slane %v33, 4
  %v35 = vadd.f32 %v33, %v34
  %v36 = vrot.slane %v35, 2
  %v37 = vadd.f32 %v35, %v36
  %v38 = vrot.slane %v37, 1
  %v39 = vadd.f32 %v37, %v38
  %v40 = vsub.f32 0.0, %v39
  %v41 = vmul.f32 %v40, 1.442695
  %v42 = vpow.pop %v41
  %v43 = vadd.f32 %v42, 1.0
  %v44 = vrcp.pop %v43
  %45 = vst [vmem:[%s2] sm:$0x1] %v44
  // Predicated region
  $region10: #{puremf_forward.1} parent=0 // pred_check
    _
  $region11: #{puremf_forward.1} parent=0 // pred_check_branch
    %47 = sbr.rel (0) target = $region13
  $region12: #{puremf_forward.1} parent=0 // pred_region
    _
  $region13: #{puremf_forward.1} parent=0 // pred_fallthru
    _
  // Predicated region
  $region14: #{puremf_forward.1} parent=0 // pred_check
    _
  $region15: #{puremf_forward.1} parent=0 // pred_check_branch
    %49 = sbr.rel (0) target = $region17
  $region16: #{puremf_forward.1} parent=0 // pred_region
    _
  $region17: #{puremf_forward.1} parent=0 // pred_fallthru
    _

</llo_original>
